<compile_context>
chip_gen: v5e
topology: v5e:2x2
jax: 0.10.0
libtpu: 0.0.40
codegen_flags: <defaults>
</compile_context>

<pallas_src>
import jax
import jax.numpy as jnp
from jax.experimental import pallas as pl
from jax.experimental.pallas import tpu as pltpu


def _pick_tile(dim, candidates):
    for c in candidates:
        if c <= dim and dim % c == 0:
            return c
    return dim  # full-dim block is always legal


def _conv1x1_kernel(x_ref, w_ref, b_ref, o_ref, acc_ref):
    # x_ref: (tm, tk) activations, w_ref: (tk, tn) weight, b_ref: (1, tn) bias
    k = pl.program_id(2)

    @pl.when(k == 0)
    def _():
        acc_ref[...] = jnp.zeros_like(acc_ref)

    acc_ref[...] += jnp.dot(x_ref[...], w_ref[...],
                            preferred_element_type=jnp.float32)

    @pl.when(k == pl.num_programs(2) - 1)
    def _():
        o_ref[...] = (acc_ref[...] +
                      b_ref[...].astype(jnp.float32)).astype(o_ref.dtype)


def _conv1x1_maxpool_kernel(x_ref, w_ref, b_ref, o_ref, acc_ref):
    # x_ref: (1, hw_tile, Cin), w_ref: (Cin, Cout), b_ref: (1, Cout)
    # o_ref: (1, 1, Cout), acc_ref: (1, Cout) running spatial max (pre-bias)
    s = pl.program_id(1)

    @pl.when(s == 0)
    def _():
        acc_ref[...] = jnp.full_like(acc_ref, -jnp.inf)

    y = jnp.dot(x_ref[0], w_ref[...], preferred_element_type=jnp.float32)
    acc_ref[...] = jnp.maximum(acc_ref[...], jnp.max(y, axis=0, keepdims=True))

    @pl.when(s == pl.num_programs(1) - 1)
    def _():
        o_ref[0] = (acc_ref[...] +
                    b_ref[...].astype(jnp.float32)).astype(o_ref.dtype)


def _conv1x1(x2d, wt, b2d, out_dtype):
    M, K = x2d.shape
    Cout = wt.shape[1]
    tm = _pick_tile(M, (512, 256, 128, 64, 32, 16, 8))
    tn = _pick_tile(Cout, (256, 128))
    tk = _pick_tile(K, (512, 256, 128))
    grid = (M // tm, Cout // tn, K // tk)
    return pl.pallas_call(
        _conv1x1_kernel,
        out_shape=jax.ShapeDtypeStruct((M, Cout), out_dtype),
        grid=grid,
        in_specs=[
            pl.BlockSpec((tm, tk), lambda i, j, k: (i, k)),
            pl.BlockSpec((tk, tn), lambda i, j, k: (k, j)),
            pl.BlockSpec((1, tn), lambda i, j, k: (0, j)),
        ],
        out_specs=pl.BlockSpec((tm, tn), lambda i, j, k: (i, j)),
        scratch_shapes=[pltpu.VMEM((tm, tn), jnp.float32)],
        compiler_params=pltpu.CompilerParams(
            dimension_semantics=("parallel", "parallel", "arbitrary")),
    )(x2d, wt, b2d)


def _conv1x1_maxpool(x3d, wt, b2d, out_dtype):
    N, HW, K = x3d.shape
    Cout = wt.shape[1]
    hw_tile = _pick_tile(HW, (512, 256, 128, 64, 32, 16, 8))
    grid = (N, HW // hw_tile)
    return pl.pallas_call(
        _conv1x1_maxpool_kernel,
        out_shape=jax.ShapeDtypeStruct((N, 1, Cout), out_dtype),
        grid=grid,
        in_specs=[
            pl.BlockSpec((1, hw_tile, K), lambda n, s: (n, s, 0)),
            pl.BlockSpec((K, Cout), lambda n, s: (0, 0)),   # resident weight
            pl.BlockSpec((1, Cout), lambda n, s: (0, 0)),   # resident bias
        ],
        out_specs=pl.BlockSpec((1, 1, Cout), lambda n, s: (n, 0, 0)),
        scratch_shapes=[pltpu.VMEM((1, Cout), jnp.float32)],
        compiler_params=pltpu.CompilerParams(
            dimension_semantics=("parallel", "arbitrary")),
    )(x3d, wt, b2d)


def custom_efficientnet_head(features, weight, bias, pooling=False):
    """final_layer (1x1 conv) + optional AdaptiveMaxPool2d(1) of CustomEfficientNet.

    features: (B, T, Cin, fh, fw)  -- stand-in for EfficientNet.extract_features output
    weight:   (Cout, Cin)          -- final_layer 1x1 conv weight (kernel squeezed)
    bias:     (Cout,)
    Returns (B, T, Cout, fh, fw), or (B, T, Cout) if pooling=True.
    """
    B, T, Cin, fh, fw = features.shape
    Cout = weight.shape[0]
    N = B * T
    HW = fh * fw
    out_dtype = features.dtype

    # Layout plumbing (outside the kernel): NCHW -> spatial rows, channels last,
    # so the Pallas output slab is lane-dense in out_dim.
    x_nhwc = jnp.transpose(features.reshape(N, Cin, HW), (0, 2, 1))  # (N, HW, Cin)
    wt = jnp.transpose(weight)                                       # (Cin, Cout)
    b2d = bias.reshape(1, Cout)

    if pooling:
        y = _conv1x1_maxpool(x_nhwc, wt, b2d, out_dtype)             # (N, 1, Cout)
        return y.reshape(B, T, Cout)

    x2d = x_nhwc.reshape(N * HW, Cin)
    y2d = _conv1x1(x2d, wt, b2d, out_dtype)                          # (N*HW, Cout)
    y = jnp.transpose(y2d.reshape(N, HW, Cout), (0, 2, 1))           # (N, Cout, HW)
    return y.reshape(B, T, Cout, fh, fw)


if __name__ == "__main__":
    key = jax.random.PRNGKey(0)
    # Small stand-in shapes: mid_dim=32 (vs 1280/1792), out_dim=128 (vs 1024),
    # feat_reso=(4,4) (resolution=128 case), B=2 videos of T=2 frames.
    B, T = 2, 2
    Cin, Cout = 32, 128
    fh, fw = 4, 4

    k1, k2, k3 = jax.random.split(key, 3)
    features = jax.random.normal(k1, (B, T, Cin, fh, fw), dtype=jnp.float32)
    weight = jax.random.normal(k2, (Cout, Cin), dtype=jnp.float32) * 0.05
    bias = jax.random.normal(k3, (Cout,), dtype=jnp.float32) * 0.1

    # Default path (pooling=False): conv only.
    y = custom_efficientnet_head(features, weight, bias, pooling=False)
    jax.block_until_ready(y)
    # Pooling path: conv + AdaptiveMaxPool2d(1) fused.
    yp = custom_efficientnet_head(features, weight, bias, pooling=True)
    jax.block_until_ready(yp)

    # Pure-JAX reference (identical math to the PyTorch final_layer / pooling).
    f = features.reshape(B * T, Cin, fh, fw)
    ref = jnp.einsum("nchw,oc->nohw", f, weight) + bias[None, :, None, None]
    ref_nopool = ref.reshape(B, T, Cout, fh, fw)
    ref_pool = jnp.max(ref, axis=(2, 3)).reshape(B, T, Cout)

    assert y.shape == (B, T, Cout, fh, fw)
    assert yp.shape == (B, T, Cout)
    assert jnp.allclose(y, ref_nopool, atol=1e-4, rtol=1e-4), "conv path mismatch"
    assert jnp.allclose(yp, ref_pool, atol=1e-4, rtol=1e-4), "pooled path mismatch"

    print("KERNEL_OK")
</pallas_src>

<mosaic_0001>
module attributes {stable_mosaic.version = 11 : i64} {
  func.func @_conv1x1_kernel(%arg0: i32, %arg1: i32, %arg2: i32, %arg3: memref<64x32xf32, #tpu.memory_space<vmem>>, %arg4: memref<32x128xf32, #tpu.memory_space<vmem>>, %arg5: memref<1x128xf32, #tpu.memory_space<vmem>>, %arg6: memref<64x128xf32, #tpu.memory_space<vmem>>, %arg7: memref<64x128xf32, #tpu.memory_space<vmem>>) attributes {dimension_semantics = [#tpu.dimension_semantics<parallel>, #tpu.dimension_semantics<parallel>, #tpu.dimension_semantics<arbitrary>], iteration_bounds = array<i64: 1, 1, 1>, scalar_prefetch = 0 : i64, scratch_operands = 1 : i64, tpu.core_type = #tpu.core_type<tc>, window_params = [{transform_indices = @transform_0, window_bounds = array<i64: 64, 32>}, {transform_indices = @transform_1, window_bounds = array<i64: 32, 128>}, {transform_indices = @transform_2, window_bounds = array<i64: 1, 128>}, {transform_indices = @transform_3, window_bounds = array<i64: 64, 128>}]} {
    %c0_i32 = arith.constant 0 : i32
    %0 = arith.cmpi eq, %arg2, %c0_i32 : i32
    %1 = arith.extui %0 : i1 to i32
    %c0_i32_0 = arith.constant 0 : i32
    %2 = arith.cmpi ne, %1, %c0_i32_0 : i32
    scf.if %2 {
      %cst_10 = arith.constant 0.000000e+00 : f32
      %12 = vector.broadcast %cst_10 : f32 to vector<64x128xf32>
      %c0_11 = arith.constant 0 : index
      %c0_12 = arith.constant 0 : index
      %13 = vector.load %arg7[%c0_11, %c0_12] : memref<64x128xf32, #tpu.memory_space<vmem>>, vector<64x128xf32>
      tpu.vector_store %arg7[%c0_11, %c0_12], %12 {strides = array<i32>} : memref<64x128xf32, #tpu.memory_space<vmem>>, vector<64x128xf32>,
    } else {
    }
    %c0 = arith.constant 0 : index
    %c0_1 = arith.constant 0 : index
    %3 = vector.load %arg7[%c0, %c0_1] : memref<64x128xf32, #tpu.memory_space<vmem>>, vector<64x128xf32>
    %c0_2 = arith.constant 0 : index
    %c0_3 = arith.constant 0 : index
    %4 = vector.load %arg3[%c0_2, %c0_3] : memref<64x32xf32, #tpu.memory_space<vmem>>, vector<64x32xf32>
    %c0_4 = arith.constant 0 : index
    %c0_5 = arith.constant 0 : index
    %5 = vector.load %arg4[%c0_4, %c0_5] : memref<32x128xf32, #tpu.memory_space<vmem>>, vector<32x128xf32>
    %cst = arith.constant dense<0.000000e+00> : vector<64x128xf32>
    %6 = tpu.matmul %4, %5, %cst {dimension_numbers = #tpu.dot_dimension_numbers<[1], [0], [0], [1], [0, 0, 1, 1], [], []>} : vector<64x32xf32>, vector<32x128xf32>, vector<64x128xf32> -> vector<64x128xf32>
    %7 = arith.addf %3, %6 : vector<64x128xf32>
    %c0_6 = arith.constant 0 : index
    %c0_7 = arith.constant 0 : index
    %8 = vector.load %arg7[%c0_6, %c0_7] : memref<64x128xf32, #tpu.memory_space<vmem>>, vector<64x128xf32>
    tpu.vector_store %arg7[%c0_6, %c0_7], %7 {strides = array<i32>} : memref<64x128xf32, #tpu.memory_space<vmem>>, vector<64x128xf32>,
    %c0_i32_8 = arith.constant 0 : i32
    %9 = arith.cmpi eq, %arg2, %c0_i32_8 : i32
    %10 = arith.extui %9 : i1 to i32
    %c0_i32_9 = arith.constant 0 : i32
    %11 = arith.cmpi ne, %10, %c0_i32_9 : i32
    scf.if %11 {
      %c0_10 = arith.constant 0 : index
      %c0_11 = arith.constant 0 : index
      %12 = vector.load %arg7[%c0_10, %c0_11] : memref<64x128xf32, #tpu.memory_space<vmem>>, vector<64x128xf32>
      %c0_12 = arith.constant 0 : index
      %c0_13 = arith.constant 0 : index
      %13 = vector.load %arg5[%c0_12, %c0_13] : memref<1x128xf32, #tpu.memory_space<vmem>>, vector<1x128xf32>
      %14 = vector.broadcast %13 : vector<1x128xf32> to vector<64x128xf32>
      %15 = arith.addf %12, %14 : vector<64x128xf32>
      %c0_14 = arith.constant 0 : index
      %c0_15 = arith.constant 0 : index
      %16 = vector.load %arg6[%c0_14, %c0_15] : memref<64x128xf32, #tpu.memory_space<vmem>>, vector<64x128xf32>
      tpu.vector_store %arg6[%c0_14, %c0_15], %15 {strides = array<i32>} : memref<64x128xf32, #tpu.memory_space<vmem>>, vector<64x128xf32>,
    } else {
    }
    return
  }
  func.func @transform_0(%arg0: i32, %arg1: i32, %arg2: i32) -> (i32, i32) {
    %c0_i32 = arith.constant 0 : i32
    return %arg0, %arg2 : i32, i32
  }
  func.func @transform_1(%arg0: i32, %arg1: i32, %arg2: i32) -> (i32, i32) {
    %c0_i32 = arith.constant 0 : i32
    return %arg2, %arg1 : i32, i32
  }
  func.func @transform_2(%arg0: i32, %arg1: i32, %arg2: i32) -> (i32, i32) {
    %c0_i32 = arith.constant 0 : i32
    %c0_i32_0 = arith.constant 0 : i32
    return %c0_i32, %arg1 : i32, i32
  }
  func.func @transform_3(%arg0: i32, %arg1: i32, %arg2: i32) -> (i32, i32) {
    %c0_i32 = arith.constant 0 : i32
    return %arg0, %arg1 : i32, i32
  }
}

</mosaic_0001>

<llo_original>
// kernel: tpu_custom_call.1
$region0: #{tpu_custom_call.1}
  #allocation0 [shape = 'u32[]', space=smem, size = 0x4, offset = 0x4, fixed_abs, tag = 'smem constant byte address 0x4 - core index']
  #allocation1 [shape = 'u32[72,128]{1,0:T(1,128)}', space=vmem, size = 0x9000, scoped, tag = 'internal scratch']
  #allocation2 [shape = 'f32[64,128]{1,0:T(8,128)}', space=vmem, size = 0x8000, scoped, tag = 'scratch operand']
  %s0 = inlined_call_operand.vmem [shape: f32[64,32], index: 0, kind: input, shape index: {}]
  %s1 = inlined_call_operand.vmem [shape: f32[32,128], index: 1, kind: input, shape index: {}]
  %s2 = inlined_call_operand.vmem [shape: f32[1,128], index: 2, kind: input, shape index: {}]
  %s3 = inlined_call_operand.hbm [shape: f32[64,128], index: 3, kind: output, shape index: {}]
  %s4 = sld [smem:[#allocation0]]
  $region30: #{tpu_custom_call.1} parent=0
    _
  %s6 = ssub.s32 1, %s4
  %s7 = scalar_select 0, %s6, %s4
  $region1: #{tpu_custom_call.1} parent=0
    #allocation3 [shape = 'u8[32768]{0}', space=vmem, size = 0x8000, scoped, tag = 'output window, operand 0, single buffered']
    #allocation4 [shape = 's32[1]{0}', space=sflag, size = 0x4, scoped, tag = 'scoped memory for tpu_custom_call.1']
    %8 = vsyncpa [#allocation4], 0
    // Predicated region
    $region2: #{tpu_custom_call.1} parent=1 // pred_check
      _
    $region3: #{tpu_custom_call.1} parent=1 // pred_check_branch
      %10 = sbr.rel (0) target = $region5
    $region4: #{tpu_custom_call.1} parent=1 // pred_region
      _
    $region5: #{tpu_custom_call.1} parent=1 // pred_fallthru
      _
    // Predicated region
    $region6: #{tpu_custom_call.1} parent=1 // pred_check
      _
    $region7: #{tpu_custom_call.1} parent=1 // pred_check_branch
      %12 = sbr.rel (0) target = $region9
    $region8: #{tpu_custom_call.1} parent=1 // pred_region
      _
    $region9: #{tpu_custom_call.1} parent=1 // pred_fallthru
      _
    // Predicated region
    $region10: #{tpu_custom_call.1} parent=1 // pred_check
      _
    $region11: #{tpu_custom_call.1} parent=1 // pred_check_branch
      %14 = sbr.rel (0) target = $region13
    $region12: #{tpu_custom_call.1} parent=1 // pred_region
      _
    $region13: #{tpu_custom_call.1} parent=1 // pred_fallthru
      _
    %p15 = scmp.eq.s32.totalorder 0, 0
    // Predicated region
    $region14: #{tpu_custom_call.1} parent=1 // pred_check
      %p16 = pneg %p15
    $region15: #{tpu_custom_call.1} parent=1 // pred_check_branch
      %18 = sbr.rel (%p16) target = $region17
    $region16: #{tpu_custom_call.1} parent=1 // pred_region
      %19 = vst [vmem:[#allocation2] sm:$0xff] 0.0
      %20 = vst [vmem:[#allocation2 + $0x8] sm:$0xff] 0.0
      %21 = vst [vmem:[#allocation2 + $0x10] sm:$0xff] 0.0
      %22 = vst [vmem:[#allocation2 + $0x18] sm:$0xff] 0.0
      %23 = vst [vmem:[#allocation2 + $0x20] sm:$0xff] 0.0
      %24 = vst [vmem:[#allocation2 + $0x28] sm:$0xff] 0.0
      %25 = vst [vmem:[#allocation2 + $0x30] sm:$0xff] 0.0
      %26 = vst [vmem:[#allocation2 + $0x38] sm:$0xff] 0.0
    $region17: #{tpu_custom_call.1} parent=1 // pred_fallthru
      _
    %v27 = vld [vmem:[#allocation2] sm:$0xff]
    %v28 = vld [vmem:[#allocation2 + $0x8] sm:$0xff]
    %v29 = vld [vmem:[#allocation2 + $0x10] sm:$0xff]
    %v30 = vld [vmem:[#allocation2 + $0x18] sm:$0xff]
    %v31 = vld [vmem:[#allocation2 + $0x20] sm:$0xff]
    %v32 = vld [vmem:[#allocation2 + $0x28] sm:$0xff]
    %v33 = vld [vmem:[#allocation2 + $0x30] sm:$0xff]
    %v34 = vld [vmem:[#allocation2 + $0x38] sm:$0xff]
    %v35 = vld [vmem:[%s0] sm:$0xff]
    %v36 = vld [vmem:[%s0 + $0x8] sm:$0xff]
    %v37 = vld [vmem:[%s0 + $0x10] sm:$0xff]
    %v38 = vld [vmem:[%s0 + $0x18] sm:$0xff]
    %v39 = vld [vmem:[%s0 + $0x20] sm:$0xff]
    %v40 = vld [vmem:[%s0 + $0x28] sm:$0xff]
    %v41 = vld [vmem:[%s0 + $0x30] sm:$0xff]
    %v42 = vld [vmem:[%s0 + $0x38] sm:$0xff]
    %v43 = vld [vmem:[%s1] sm:$0xff]
    %v44 = vld [vmem:[%s1 + $0x8] sm:$0xff]
    %v45 = vld [vmem:[%s1 + $0x10] sm:$0xff]
    %v46 = vld [vmem:[%s1 + $0x18] sm:$0xff]
    %vm47 = vcmask 261120
    %v49 = vsel %vm47, %v35, 0
    %v52 = vsel %vm47, %v36, 0
    %v55 = vsel %vm47, %v37, 0
    %v58 = vsel %vm47, %v38, 0
    %v61 = vsel %vm47, %v39, 0
    %v64 = vsel %vm47, %v40, 0
    %v67 = vsel %vm47, %v41, 0
    %v70 = vsel %vm47, %v42, 0
    %72 = vmatpush.msra.mxu0 0.0
    %73 = vmatpush.msra.mxu0 0.0
    %74 = vmatpush.msra.mxu0 0.0
    %75 = vmatpush.msra.mxu0 0.0
    %76 = vmatpush.msra.mxu0 0.0
    %77 = vmatpush.msra.mxu0 0.0
    %78 = vmatpush.msra.mxu0 0.0
    %79 = vmatpush.msra.mxu0 0.0
    %80 = vmatpush.msra.mxu0 0.0
    %81 = vmatpush.msra.mxu0 0.0
    %82 = vmatpush.msra.mxu0 0.0
    %83 = vmatpush.msra.mxu0 0.0
    %84 = vmatpush.msra.mxu0 %v46
    %85 = vmatpush.msra.mxu0 %v45
    %86 = vmatpush.msra.mxu0 %v44
    %87 = vmatpush.msra.mxu0 %v43
    %88 = vmatmul.f32.gmra.mxu0 %v49
    %v89 = vpop.f32.mrf.mxu0
    %v90 = vadd.f32 0.0, %v89
    %91 = vmatmul.f32.gmra.mxu0 %v52
    %v92 = vpop.f32.mrf.mxu0
    %v93 = vadd.f32 0.0, %v92
    %94 = vmatmul.f32.gmra.mxu0 %v55
    %v95 = vpop.f32.mrf.mxu0
    %v96 = vadd.f32 0.0, %v95
    %97 = vmatmul.f32.gmra.mxu0 %v58
    %v98 = vpop.f32.mrf.mxu0
    %v99 = vadd.f32 0.0, %v98
    %100 = vmatmul.f32.gmra.mxu0 %v61
    %v101 = vpop.f32.mrf.mxu0
    %v102 = vadd.f32 0.0, %v101
    %103 = vmatmul.f32.gmra.mxu0 %v64
    %v104 = vpop.f32.mrf.mxu0
    %v105 = vadd.f32 0.0, %v104
    %106 = vmatmul.f32.gmra.mxu0 %v67
    %v107 = vpop.f32.mrf.mxu0
    %v108 = vadd.f32 0.0, %v107
    %109 = vmatmul.f32.gmra.mxu0 %v70
    %v110 = vpop.f32.mrf.mxu0
    %v111 = vadd.f32 0.0, %v110
    %112 = vdwg.mxu0
    %v113 = vadd.f32 %v27, %v90
    %v114 = vadd.f32 %v28, %v93
    %v115 = vadd.f32 %v29, %v96
    %v116 = vadd.f32 %v30, %v99
    %v117 = vadd.f32 %v31, %v102
    %v118 = vadd.f32 %v32, %v105
    %v119 = vadd.f32 %v33, %v108
    %v120 = vadd.f32 %v34, %v111
    %121 = vst [vmem:[#allocation2] sm:$0xff] %v113
    %122 = vst [vmem:[#allocation2 + $0x8] sm:$0xff] %v114
    %123 = vst [vmem:[#allocation2 + $0x10] sm:$0xff] %v115
    %124 = vst [vmem:[#allocation2 + $0x18] sm:$0xff] %v116
    %125 = vst [vmem:[#allocation2 + $0x20] sm:$0xff] %v117
    %126 = vst [vmem:[#allocation2 + $0x28] sm:$0xff] %v118
    %127 = vst [vmem:[#allocation2 + $0x30] sm:$0xff] %v119
    %128 = vst [vmem:[#allocation2 + $0x38] sm:$0xff] %v120
    // Predicated region
    $region18: #{tpu_custom_call.1} parent=1 // pred_check
      %p129 = pneg %p15
    $region19: #{tpu_custom_call.1} parent=1 // pred_check_branch
      %131 = sbr.rel (%p129) target = $region21
    $region20: #{tpu_custom_call.1} parent=1 // pred_region
      %v132 = vld [vmem:[#allocation2] sm:$0xff]
      %v133 = vld [vmem:[#allocation2 + $0x8] sm:$0xff]
      %v134 = vld [vmem:[#allocation2 + $0x10] sm:$0xff]
      %v135 = vld [vmem:[#allocation2 + $0x18] sm:$0xff]
      %v136 = vld [vmem:[#allocation2 + $0x20] sm:$0xff]
      %v137 = vld [vmem:[#allocation2 + $0x28] sm:$0xff]
      %v138 = vld [vmem:[#allocation2 + $0x30] sm:$0xff]
      %v139 = vld [vmem:[#allocation2 + $0x38] sm:$0xff]
      %v140 = vld [vmem:[%s2] sm:$0x1]
      %v142 = vperm.slane %v140, 0
      %v144 = vadd.f32 %v132, %v142
      %v145 = vadd.f32 %v133, %v142
      %v146 = vadd.f32 %v134, %v142
      %v147 = vadd.f32 %v135, %v142
      %v148 = vadd.f32 %v136, %v142
      %v149 = vadd.f32 %v137, %v142
      %v150 = vadd.f32 %v138, %v142
      %v151 = vadd.f32 %v139, %v142
      %152 = vst [vmem:[#allocation3] sm:$0xff] %v144
      %153 = vst [vmem:[#allocation3 + $0x8] sm:$0xff] %v145
      %154 = vst [vmem:[#allocation3 + $0x10] sm:$0xff] %v146
      %155 = vst [vmem:[#allocation3 + $0x18] sm:$0xff] %v147
      %156 = vst [vmem:[#allocation3 + $0x20] sm:$0xff] %v148
      %157 = vst [vmem:[#allocation3 + $0x28] sm:$0xff] %v149
      %158 = vst [vmem:[#allocation3 + $0x30] sm:$0xff] %v150
      %159 = vst [vmem:[#allocation3 + $0x38] sm:$0xff] %v151
    $region21: #{tpu_custom_call.1} parent=1 // pred_fallthru
      _
    // Predicated region
    $region22: #{tpu_custom_call.1} parent=1 // pred_check
      _
    $region23: #{tpu_custom_call.1} parent=1 // pred_check_branch
      %161 = sbr.rel (0) target = $region25
    $region24: #{tpu_custom_call.1} parent=1 // pred_region
      %163 = vsyncadd [#allocation4], 0
      %s164 = sshll.u32 [#allocation3], 4
      %s165 = int_to_ptr.vmem [resolvable:$true] %s164
      %s166 = sshll.u32 %s3, 4
      %s167 = int_to_ptr.hbm [resolvable:$true] %s166
      %172 = dma.vmem_to_hbm [thread:$0]  %s165, 1024, %s167, [#allocation4], 128, 128, 8
    $region25: #{tpu_custom_call.1} parent=1 // pred_fallthru
      _
    // Predicated region
    $region26: #{tpu_custom_call.1} parent=1 // pred_check
      _
    $region27: #{tpu_custom_call.1} parent=1 // pred_check_branch
      %174 = sbr.rel (0) target = $region29
    $region28: #{tpu_custom_call.1} parent=1 // pred_region
      %176 = dma.done [#allocation4], 1024
    $region29: #{tpu_custom_call.1} parent=1 // pred_fallthru
      _
    %177 = vsyncpa [#allocation4], 1

</llo_original>
